<compile_context>
chip_gen: v7x
topology: tpu7x:2x2x1
jax: 0.10.0
libtpu: 0.0.40
codegen_flags: <defaults>
</compile_context>

<pallas_src>
import functools

import jax
import jax.numpy as jnp
from jax.experimental import pallas as pl
from jax.experimental.pallas import tpu as pltpu

LANE = 128      # vreg lane width: feature dims padded to multiples of this
SUBLANE = 8     # sublane width: batch tiles are multiples of this


def _round_up(x, m):
    return ((x + m - 1) // m) * m


def _mlp_kernel(num_layers, *refs):
    """One batch tile of the fused forward pass.

    Ref order (inputs, then output):
      edge_ref          (TB, E_pad)
      noise_ref         (TB, 1)            float32
      wn_ref, bn_ref    (1, Dn_pad) x2     noise-embedding Linear(1, Dn)
      w1e_ref           (E_pad, H_pad)     first hidden layer, edge part
      w1n_ref           (Dn_pad, H_pad)    first hidden layer, noise-emb part
      b1_ref            (1, H_pad)
      [w_i, b_i]        (H_pad, H_pad), (1, H_pad)  for remaining hidden layers
      wo_ref, bo_ref    (H_pad, O_pad), (1, O_pad)  output Linear
      out_ref           (TB, O_pad)
    """
    edge_ref, noise_ref, wn_ref, bn_ref, w1e_ref, w1n_ref, b1_ref = refs[:7]
    out_ref = refs[-1]

    edge = edge_ref[...]
    if edge.dtype != jnp.float32:
        edge = edge.astype(jnp.float32)
    noise = noise_ref[...]                       # (TB, 1) f32

    # Noise embedding Linear(1, Dn): contraction depth 1 -> keep it off the
    # MXU; VPU broadcast multiply (outer product) + bias + ReLU.
    emb = jnp.maximum(noise * wn_ref[...] + bn_ref[...], 0.0)

    # First hidden layer: concat([edge, emb]) @ W1 == edge @ W1e + emb @ W1n
    # (weight matrix pre-split in the wrapper; no in-kernel concatenate).
    x = (jnp.dot(edge, w1e_ref[...], preferred_element_type=jnp.float32)
         + jnp.dot(emb, w1n_ref[...], preferred_element_type=jnp.float32)
         + b1_ref[...])
    x = jnp.maximum(x, 0.0)

    idx = 7
    for _ in range(num_layers - 1):
        w_ref, b_ref = refs[idx], refs[idx + 1]
        idx += 2
        x = jnp.maximum(
            jnp.dot(x, w_ref[...], preferred_element_type=jnp.float32)
            + b_ref[...], 0.0)

    wo_ref, bo_ref = refs[idx], refs[idx + 1]
    out_ref[...] = (jnp.dot(x, wo_ref[...], preferred_element_type=jnp.float32)
                    + bo_ref[...]).astype(out_ref.dtype)


def complex_model_forward(edge_vectors, noise_levels, params, num_layers,
                          *, block_b=512):
    """Wrapper: unsqueeze / zero-pad once, then one fused batch-tiled call."""
    (wn, bn, w1e, w1n, b1, hidden, wo, bo) = params

    B, E = edge_vectors.shape
    Dn = wn.shape[1]
    H = b1.shape[1]
    O = bo.shape[1]

    E_p, Dn_p, H_p, O_p = (_round_up(d, LANE) for d in (E, Dn, H, O))

    def pad2(a, rows, cols):
        a = a.astype(jnp.float32)
        return jnp.pad(a, ((0, rows - a.shape[0]), (0, cols - a.shape[1])))

    # Zero-pad every weight/bias once in the wrapper (inert: zero weight
    # columns + ReLU(0)=0 => padded units contribute nothing downstream).
    weights = [pad2(wn, 1, Dn_p), pad2(bn, 1, Dn_p),
               pad2(w1e, E_p, H_p), pad2(w1n, Dn_p, H_p), pad2(b1, 1, H_p)]
    for (w, b) in hidden:
        weights += [pad2(w, H_p, H_p), pad2(b, 1, H_p)]
    weights += [pad2(wo, H_p, O_p), pad2(bo, 1, O_p)]
    # TODO(synk): on v6e/v7x cast weight matrices (not biases) to bfloat16 to
    # halve resident VMEM / HBM bytes; f32 kept here for the exact check.

    # Batch tiling: TB rows per grid step (multiple of 8); batch zero-padded up
    # to a multiple of TB, padded rows sliced off after the call.
    TB = min(_round_up(block_b, SUBLANE), _round_up(B, SUBLANE))
    B_p = _round_up(B, TB)

    edge_p = jnp.pad(edge_vectors, ((0, B_p - B), (0, E_p - E)))
    noise_p = jnp.pad(noise_levels.reshape(B, 1).astype(jnp.float32),
                      ((0, B_p - B), (0, 0)))

    grid = (B_p // TB,)

    def tile_spec(cols):                       # batch-tiled arrays
        return pl.BlockSpec((TB, cols), lambda i: (i, 0))

    def resident_spec(shape):                  # weights: VMEM-resident
        return pl.BlockSpec(shape, lambda i: (0, 0))

    in_specs = [tile_spec(E_p), tile_spec(1)]
    in_specs += [resident_spec(w.shape) for w in weights]

    # Advisory cost estimate so XLA schedules surrounding glue sensibly.
    flops = 2 * B_p * (E_p * H_p + Dn_p * H_p
                       + (num_layers - 1) * H_p * H_p + H_p * O_p)
    param_bytes = sum(int(w.size) * w.dtype.itemsize for w in weights)
    bytes_accessed = (param_bytes
                      + B_p * E_p * edge_p.dtype.itemsize
                      + B_p * 4 + B_p * O_p * 4)
    cost = pl.CostEstimate(flops=int(flops), transcendentals=0,
                           bytes_accessed=int(bytes_accessed))

    # VMEM budget: resident weights + double-buffered activation tiles,
    # clamped to 64 MiB so the same limit is valid on v7x.
    tile_bytes = 2 * TB * (E_p + 1 + O_p + 2 * max(H_p, Dn_p)) * 4
    vmem_limit = int(min(max(2 * (param_bytes + tile_bytes), 32 * 2**20),
                         64 * 2**20))

    kernel = functools.partial(_mlp_kernel, num_layers)
    out_padded = pl.pallas_call(
        kernel,
        out_shape=jax.ShapeDtypeStruct((B_p, O_p), jnp.float32),
        grid=grid,
        in_specs=in_specs,
        out_specs=tile_spec(O_p),
        compiler_params=pltpu.CompilerParams(
            dimension_semantics=("parallel",),
            vmem_limit_bytes=vmem_limit),
        cost_estimate=cost,
    )(edge_p, noise_p, *weights)

    return out_padded[:B, :O]


def init_params(key, nb_edges, noise_embedding_dim, hidden_dim, num_layers,
                output_dim):
    """Deterministic synthetic params (weights as (in, out), biases (1, out))."""
    def lin(key, fan_in, fan_out):
        kw, kb = jax.random.split(key)
        scale = 1.0 / jnp.sqrt(jnp.float32(fan_in))
        w = jax.random.uniform(kw, (fan_in, fan_out), jnp.float32, -scale, scale)
        b = jax.random.uniform(kb, (1, fan_out), jnp.float32, -scale, scale)
        return w, b

    keys = jax.random.split(key, 2 + num_layers + 1)
    wn, bn = lin(keys[0], 1, noise_embedding_dim)

    # First hidden layer: a single Linear over the concat dim, stored pre-split.
    in_dim = nb_edges + noise_embedding_dim
    w1, b1 = lin(keys[1], in_dim, hidden_dim)
    w1e, w1n = w1[:nb_edges], w1[nb_edges:]

    hidden = []
    for i in range(num_layers - 1):
        hidden.append(lin(keys[2 + i], hidden_dim, hidden_dim))

    wo, bo = lin(keys[-1], hidden_dim, output_dim)
    return (wn, bn, w1e, w1n, b1, tuple(hidden), wo, bo)


def reference_forward(edge_vectors, noise_levels, params):
    """Plain-JAX reference mirroring the PyTorch module exactly."""
    (wn, bn, w1e, w1n, b1, hidden, wo, bo) = params
    noise = noise_levels.reshape(-1, 1).astype(jnp.float32)
    emb = jnp.maximum(noise @ wn + bn, 0.0)
    x = jnp.concatenate([edge_vectors.astype(jnp.float32), emb], axis=-1)
    w1 = jnp.concatenate([w1e, w1n], axis=0)
    x = jnp.maximum(x @ w1 + b1, 0.0)
    for (w, b) in hidden:
        x = jnp.maximum(x @ w + b, 0.0)
    return x @ wo + bo


if __name__ == "__main__":
    # Small synthetic config consistent with the module's __init__.
    nb_edges = 8
    noise_embedding_dim = 8
    hidden_dim = 32
    num_layers = 2
    output_dim = 8
    batch = 2

    key = jax.random.PRNGKey(0)
    k_params, k_edge, k_noise = jax.random.split(key, 3)

    params = init_params(k_params, nb_edges, noise_embedding_dim, hidden_dim,
                         num_layers, output_dim)
    edge_vectors = jax.random.normal(k_edge, (batch, nb_edges), jnp.float32)
    noise_levels = jax.random.uniform(k_noise, (batch,), jnp.float32)

    out = complex_model_forward(edge_vectors, noise_levels, params, num_layers)
    out = jax.block_until_ready(out)

    ref = reference_forward(edge_vectors, noise_levels, params)
    assert out.shape == (batch, output_dim), out.shape
    assert jnp.allclose(out, ref, atol=1e-5, rtol=1e-5), \
        float(jnp.max(jnp.abs(out - ref)))

    print("KERNEL_OK")
</pallas_src>

<mosaic_0001>
module attributes {stable_mosaic.version = 11 : i64} {
  func.func @_mlp_kernel(%arg0: i32, %arg1: memref<8x128xf32, #tpu.memory_space<vmem>>, %arg2: memref<8x1xf32, #tpu.memory_space<vmem>>, %arg3: memref<1x128xf32, #tpu.memory_space<vmem>>, %arg4: memref<1x128xf32, #tpu.memory_space<vmem>>, %arg5: memref<128x128xf32, #tpu.memory_space<vmem>>, %arg6: memref<128x128xf32, #tpu.memory_space<vmem>>, %arg7: memref<1x128xf32, #tpu.memory_space<vmem>>, %arg8: memref<128x128xf32, #tpu.memory_space<vmem>>, %arg9: memref<1x128xf32, #tpu.memory_space<vmem>>, %arg10: memref<128x128xf32, #tpu.memory_space<vmem>>, %arg11: memref<1x128xf32, #tpu.memory_space<vmem>>, %arg12: memref<8x128xf32, #tpu.memory_space<vmem>>) attributes {dimension_semantics = [#tpu.dimension_semantics<parallel>], iteration_bounds = array<i64: 1>, scalar_prefetch = 0 : i64, scratch_operands = 0 : i64, tpu.core_type = #tpu.core_type<tc>, window_params = [{transform_indices = @transform_0, window_bounds = array<i64: 8, 128>}, {transform_indices = @transform_1, window_bounds = array<i64: 8, 1>}, {pipeline_mode = #tpu.pipeline_mode<synchronous>, transform_indices = @transform_2, window_bounds = array<i64: 1, 128>}, {pipeline_mode = #tpu.pipeline_mode<synchronous>, transform_indices = @transform_3, window_bounds = array<i64: 1, 128>}, {pipeline_mode = #tpu.pipeline_mode<synchronous>, transform_indices = @transform_4, window_bounds = array<i64: 128, 128>}, {pipeline_mode = #tpu.pipeline_mode<synchronous>, transform_indices = @transform_5, window_bounds = array<i64: 128, 128>}, {pipeline_mode = #tpu.pipeline_mode<synchronous>, transform_indices = @transform_6, window_bounds = array<i64: 1, 128>}, {pipeline_mode = #tpu.pipeline_mode<synchronous>, transform_indices = @transform_7, window_bounds = array<i64: 128, 128>}, {pipeline_mode = #tpu.pipeline_mode<synchronous>, transform_indices = @transform_8, window_bounds = array<i64: 1, 128>}, {pipeline_mode = #tpu.pipeline_mode<synchronous>, transform_indices = @transform_9, window_bounds = array<i64: 128, 128>}, {pipeline_mode = #tpu.pipeline_mode<synchronous>, transform_indices = @transform_10, window_bounds = array<i64: 1, 128>}, {transform_indices = @transform_11, window_bounds = array<i64: 8, 128>}]} {
    %c0 = arith.constant 0 : index
    %c0_0 = arith.constant 0 : index
    %0 = vector.load %arg1[%c0, %c0_0] : memref<8x128xf32, #tpu.memory_space<vmem>>, vector<8x128xf32>
    %c0_1 = arith.constant 0 : index
    %c0_2 = arith.constant 0 : index
    %1 = vector.load %arg2[%c0_1, %c0_2] : memref<8x1xf32, #tpu.memory_space<vmem>>, vector<8x1xf32>
    %c0_3 = arith.constant 0 : index
    %c0_4 = arith.constant 0 : index
    %2 = vector.load %arg3[%c0_3, %c0_4] : memref<1x128xf32, #tpu.memory_space<vmem>>, vector<1x128xf32>
    %3 = vector.broadcast %1 : vector<8x1xf32> to vector<8x128xf32>
    %4 = vector.broadcast %2 : vector<1x128xf32> to vector<8x128xf32>
    %5 = arith.mulf %3, %4 : vector<8x128xf32>
    %c0_5 = arith.constant 0 : index
    %c0_6 = arith.constant 0 : index
    %6 = vector.load %arg4[%c0_5, %c0_6] : memref<1x128xf32, #tpu.memory_space<vmem>>, vector<1x128xf32>
    %7 = vector.broadcast %6 : vector<1x128xf32> to vector<8x128xf32>
    %8 = arith.addf %5, %7 : vector<8x128xf32>
    %cst = arith.constant 0.000000e+00 : f32
    %9 = vector.broadcast %cst : f32 to vector<8x128xf32>
    %10 = arith.maximumf %8, %9 : vector<8x128xf32>
    %c0_7 = arith.constant 0 : index
    %c0_8 = arith.constant 0 : index
    %11 = vector.load %arg5[%c0_7, %c0_8] : memref<128x128xf32, #tpu.memory_space<vmem>>, vector<128x128xf32>
    %cst_9 = arith.constant dense<0.000000e+00> : vector<8x128xf32>
    %12 = tpu.matmul %0, %11, %cst_9 {dimension_numbers = #tpu.dot_dimension_numbers<[1], [0], [0], [1], [0, 0, 1, 1], [], []>} : vector<8x128xf32>, vector<128x128xf32>, vector<8x128xf32> -> vector<8x128xf32>
    %c0_10 = arith.constant 0 : index
    %c0_11 = arith.constant 0 : index
    %13 = vector.load %arg6[%c0_10, %c0_11] : memref<128x128xf32, #tpu.memory_space<vmem>>, vector<128x128xf32>
    %cst_12 = arith.constant dense<0.000000e+00> : vector<8x128xf32>
    %14 = tpu.matmul %10, %13, %cst_12 {dimension_numbers = #tpu.dot_dimension_numbers<[1], [0], [0], [1], [0, 0, 1, 1], [], []>} : vector<8x128xf32>, vector<128x128xf32>, vector<8x128xf32> -> vector<8x128xf32>
    %15 = arith.addf %12, %14 : vector<8x128xf32>
    %c0_13 = arith.constant 0 : index
    %c0_14 = arith.constant 0 : index
    %16 = vector.load %arg7[%c0_13, %c0_14] : memref<1x128xf32, #tpu.memory_space<vmem>>, vector<1x128xf32>
    %17 = vector.broadcast %16 : vector<1x128xf32> to vector<8x128xf32>
    %18 = arith.addf %15, %17 : vector<8x128xf32>
    %cst_15 = arith.constant 0.000000e+00 : f32
    %19 = vector.broadcast %cst_15 : f32 to vector<8x128xf32>
    %20 = arith.maximumf %18, %19 : vector<8x128xf32>
    %c0_16 = arith.constant 0 : index
    %c0_17 = arith.constant 0 : index
    %21 = vector.load %arg8[%c0_16, %c0_17] : memref<128x128xf32, #tpu.memory_space<vmem>>, vector<128x128xf32>
    %cst_18 = arith.constant dense<0.000000e+00> : vector<8x128xf32>
    %22 = tpu.matmul %20, %21, %cst_18 {dimension_numbers = #tpu.dot_dimension_numbers<[1], [0], [0], [1], [0, 0, 1, 1], [], []>} : vector<8x128xf32>, vector<128x128xf32>, vector<8x128xf32> -> vector<8x128xf32>
    %c0_19 = arith.constant 0 : index
    %c0_20 = arith.constant 0 : index
    %23 = vector.load %arg9[%c0_19, %c0_20] : memref<1x128xf32, #tpu.memory_space<vmem>>, vector<1x128xf32>
    %24 = vector.broadcast %23 : vector<1x128xf32> to vector<8x128xf32>
    %25 = arith.addf %22, %24 : vector<8x128xf32>
    %cst_21 = arith.constant 0.000000e+00 : f32
    %26 = vector.broadcast %cst_21 : f32 to vector<8x128xf32>
    %27 = arith.maximumf %25, %26 : vector<8x128xf32>
    %c0_22 = arith.constant 0 : index
    %c0_23 = arith.constant 0 : index
    %28 = vector.load %arg10[%c0_22, %c0_23] : memref<128x128xf32, #tpu.memory_space<vmem>>, vector<128x128xf32>
    %cst_24 = arith.constant dense<0.000000e+00> : vector<8x128xf32>
    %29 = tpu.matmul %27, %28, %cst_24 {dimension_numbers = #tpu.dot_dimension_numbers<[1], [0], [0], [1], [0, 0, 1, 1], [], []>} : vector<8x128xf32>, vector<128x128xf32>, vector<8x128xf32> -> vector<8x128xf32>
    %c0_25 = arith.constant 0 : index
    %c0_26 = arith.constant 0 : index
    %30 = vector.load %arg11[%c0_25, %c0_26] : memref<1x128xf32, #tpu.memory_space<vmem>>, vector<1x128xf32>
    %31 = vector.broadcast %30 : vector<1x128xf32> to vector<8x128xf32>
    %32 = arith.addf %29, %31 : vector<8x128xf32>
    %c0_27 = arith.constant 0 : index
    %c0_28 = arith.constant 0 : index
    %33 = vector.load %arg12[%c0_27, %c0_28] : memref<8x128xf32, #tpu.memory_space<vmem>>, vector<8x128xf32>
    tpu.vector_store %arg12[%c0_27, %c0_28], %32 {strides = array<i32>} : memref<8x128xf32, #tpu.memory_space<vmem>>, vector<8x128xf32>,
    return
  }
  func.func @transform_0(%arg0: i32) -> (i32, i32) {
    %c0_i32 = arith.constant 0 : i32
    %c0_i32_0 = arith.constant 0 : i32
    return %arg0, %c0_i32 : i32, i32
  }
  func.func @transform_1(%arg0: i32) -> (i32, i32) {
    %c0_i32 = arith.constant 0 : i32
    %c0_i32_0 = arith.constant 0 : i32
    return %arg0, %c0_i32 : i32, i32
  }
  func.func @transform_2(%arg0: i32) -> (i32, i32) {
    %c0_i32 = arith.constant 0 : i32
    %c0_i32_0 = arith.constant 0 : i32
    %c0_i32_1 = arith.constant 0 : i32
    return %c0_i32, %c0_i32_0 : i32, i32
  }
  func.func @transform_3(%arg0: i32) -> (i32, i32) {
    %c0_i32 = arith.constant 0 : i32
    %c0_i32_0 = arith.constant 0 : i32
    %c0_i32_1 = arith.constant 0 : i32
    return %c0_i32, %c0_i32_0 : i32, i32
  }
  func.func @transform_4(%arg0: i32) -> (i32, i32) {
    %c0_i32 = arith.constant 0 : i32
    %c0_i32_0 = arith.constant 0 : i32
    %c0_i32_1 = arith.constant 0 : i32
    return %c0_i32, %c0_i32_0 : i32, i32
  }
  func.func @transform_5(%arg0: i32) -> (i32, i32) {
    %c0_i32 = arith.constant 0 : i32
    %c0_i32_0 = arith.constant 0 : i32
    %c0_i32_1 = arith.constant 0 : i32
    return %c0_i32, %c0_i32_0 : i32, i32
  }
  func.func @transform_6(%arg0: i32) -> (i32, i32) {
    %c0_i32 = arith.constant 0 : i32
    %c0_i32_0 = arith.constant 0 : i32
    %c0_i32_1 = arith.constant 0 : i32
    return %c0_i32, %c0_i32_0 : i32, i32
  }
  func.func @transform_7(%arg0: i32) -> (i32, i32) {
    %c0_i32 = arith.constant 0 : i32
    %c0_i32_0 = arith.constant 0 : i32
    %c0_i32_1 = arith.constant 0 : i32
    return %c0_i32, %c0_i32_0 : i32, i32
  }
  func.func @transform_8(%arg0: i32) -> (i32, i32) {
    %c0_i32 = arith.constant 0 : i32
    %c0_i32_0 = arith.constant 0 : i32
    %c0_i32_1 = arith.constant 0 : i32
    return %c0_i32, %c0_i32_0 : i32, i32
  }
  func.func @transform_9(%arg0: i32) -> (i32, i32) {
    %c0_i32 = arith.constant 0 : i32
    %c0_i32_0 = arith.constant 0 : i32
    %c0_i32_1 = arith.constant 0 : i32
    return %c0_i32, %c0_i32_0 : i32, i32
  }
  func.func @transform_10(%arg0: i32) -> (i32, i32) {
    %c0_i32 = arith.constant 0 : i32
    %c0_i32_0 = arith.constant 0 : i32
    %c0_i32_1 = arith.constant 0 : i32
    return %c0_i32, %c0_i32_0 : i32, i32
  }
  func.func @transform_11(%arg0: i32) -> (i32, i32) {
    %c0_i32 = arith.constant 0 : i32
    %c0_i32_0 = arith.constant 0 : i32
    return %arg0, %c0_i32 : i32, i32
  }
}

</mosaic_0001>

<llo_original>
// kernel: tpu_custom_call.1
$region0: #{tpu_custom_call.1}
  #allocation0 [shape = 'u32[]', space=smem, size = 0x4, offset = 0x4, fixed_abs, tag = 'smem constant byte address 0x4 - core index']
  #allocation1 [shape = 'u32[144,128]{1,0:T(1,128)}', space=vmem, size = 0x12000, scoped, tag = 'internal scratch']
  %s0 = inlined_call_operand.vmem [shape: f32[8,128], index: 0, kind: input, shape index: {}]
  %s1 = inlined_call_operand.vmem [shape: f32[8,1], index: 1, kind: input, shape index: {}]
  %s2 = inlined_call_operand.vmem [shape: f32[1,128], index: 2, kind: input, shape index: {}]
  %s3 = inlined_call_operand.vmem [shape: f32[1,128], index: 3, kind: input, shape index: {}]
  %s4 = inlined_call_operand.hbm [shape: f32[128,128], index: 4, kind: input, shape index: {}]
  %s5 = inlined_call_operand.hbm [shape: f32[128,128], index: 5, kind: input, shape index: {}]
  %s6 = inlined_call_operand.vmem [shape: f32[1,128], index: 6, kind: input, shape index: {}]
  %s7 = inlined_call_operand.hbm [shape: f32[128,128], index: 7, kind: input, shape index: {}]
  %s8 = inlined_call_operand.vmem [shape: f32[1,128], index: 8, kind: input, shape index: {}]
  %s9 = inlined_call_operand.hbm [shape: f32[128,128], index: 9, kind: input, shape index: {}]
  %s10 = inlined_call_operand.vmem [shape: f32[1,128], index: 10, kind: input, shape index: {}]
  %s11 = inlined_call_operand.hbm [shape: f32[8,128], index: 11, kind: output, shape index: {}]
  %s12 = sld [smem:[#allocation0]]
  $region70: #{tpu_custom_call.1} parent=0
    _
  %s14 = ssub.s32 1, %s12
  %s15 = scalar_select 0, %s14, %s12
  $region1: #{tpu_custom_call.1} parent=0
    #allocation2 [shape = 'u8[65536]{0}', space=vmem, size = 0x10000, scoped, tag = 'input window, operand 4, single buffered']
    #allocation3 [shape = 's32[1]{0}', space=sflag, size = 0x4, scoped, tag = 'scoped memory for tpu_custom_call.1']
    #allocation4 [shape = 's32[1]{0}', space=sflag, size = 0x4, scoped, tag = 'scoped memory for tpu_custom_call.1']
    #allocation5 [shape = 'u8[65536]{0}', space=vmem, size = 0x10000, scoped, tag = 'input window, operand 5, single buffered']
    #allocation6 [shape = 's32[1]{0}', space=sflag, size = 0x4, scoped, tag = 'scoped memory for tpu_custom_call.1']
    #allocation7 [shape = 'u8[65536]{0}', space=vmem, size = 0x10000, scoped, tag = 'input window, operand 7, single buffered']
    #allocation8 [shape = 'u8[65536]{0}', space=vmem, size = 0x10000, scoped, tag = 'input window, operand 9, single buffered']
    #allocation9 [shape = 's32[1]{0}', space=sflag, size = 0x4, scoped, tag = 'scoped memory for tpu_custom_call.1']
    #allocation10 [shape = 'u8[4096]{0}', space=vmem, size = 0x1000, scoped, tag = 'output window, operand 0, single buffered']
    %16 = vsyncpa [#allocation3], 0
    %17 = vsyncpa [#allocation6], 0
    %18 = vsyncpa [#allocation9], 0
    %19 = vsyncpa [#allocation4], 0
    // Predicated region
    $region2: #{tpu_custom_call.1} parent=1 // pred_check
      _
    $region3: #{tpu_custom_call.1} parent=1 // pred_check_branch
      %21 = sbr.rel (0) target = $region5
    $region4: #{tpu_custom_call.1} parent=1 // pred_region
      _
    $region5: #{tpu_custom_call.1} parent=1 // pred_fallthru
      _
    // Predicated region
    $region6: #{tpu_custom_call.1} parent=1 // pred_check
      _
    $region7: #{tpu_custom_call.1} parent=1 // pred_check_branch
      %23 = sbr.rel (0) target = $region9
    $region8: #{tpu_custom_call.1} parent=1 // pred_region
      _
    $region9: #{tpu_custom_call.1} parent=1 // pred_fallthru
      _
    // Predicated region
    $region10: #{tpu_custom_call.1} parent=1 // pred_check
      _
    $region11: #{tpu_custom_call.1} parent=1 // pred_check_branch
      %25 = sbr.rel (0) target = $region13
    $region12: #{tpu_custom_call.1} parent=1 // pred_region
      _
    $region13: #{tpu_custom_call.1} parent=1 // pred_fallthru
      _
    // Predicated region
    $region14: #{tpu_custom_call.1} parent=1 // pred_check
      _
    $region15: #{tpu_custom_call.1} parent=1 // pred_check_branch
      %27 = sbr.rel (0) target = $region17
    $region16: #{tpu_custom_call.1} parent=1 // pred_region
      _
    $region17: #{tpu_custom_call.1} parent=1 // pred_fallthru
      _
    // Predicated region
    $region18: #{tpu_custom_call.1} parent=1 // pred_check
      _
    $region19: #{tpu_custom_call.1} parent=1 // pred_check_branch
      %29 = sbr.rel (0) target = $region21
    $region20: #{tpu_custom_call.1} parent=1 // pred_region
      %s31 = ssub.s32 2048, 2048
      %32 = vsyncadd [#allocation3], %s31
      %s33 = sshll.u32 [#allocation2], 4
      %s34 = int_to_ptr.vmem [resolvable:$true] %s33
      %39 = dma.hbm_to_vmem [thread:$0]  %s4, 2048, %s34, [#allocation3], 128, 128, 8
    $region21: #{tpu_custom_call.1} parent=1 // pred_fallthru
      _
    // Predicated region
    $region22: #{tpu_custom_call.1} parent=1 // pred_check
      _
    $region23: #{tpu_custom_call.1} parent=1 // pred_check_branch
      %41 = sbr.rel (0) target = $region25
    $region24: #{tpu_custom_call.1} parent=1 // pred_region
      %s43 = ssub.s32 2048, 2048
      %44 = vsyncadd [#allocation6], %s43
      %s45 = sshll.u32 [#allocation5], 4
      %s46 = int_to_ptr.vmem [resolvable:$true] %s45
      %51 = dma.hbm_to_vmem [thread:$0]  %s5, 2048, %s46, [#allocation6], 128, 128, 8
    $region25: #{tpu_custom_call.1} parent=1 // pred_fallthru
      _
    // Predicated region
    $region26: #{tpu_custom_call.1} parent=1 // pred_check
      _
    $region27: #{tpu_custom_call.1} parent=1 // pred_check_branch
      %53 = sbr.rel (0) target = $region29
    $region28: #{tpu_custom_call.1} parent=1 // pred_region
      _
    $region29: #{tpu_custom_call.1} parent=1 // pred_fallthru
      _
    // Predicated region
    $region30: #{tpu_custom_call.1} parent=1 // pred_check
      _
    $region31: #{tpu_custom_call.1} parent=1 // pred_check_branch
      %55 = sbr.rel (0) target = $region33
    $region32: #{tpu_custom_call.1} parent=1 // pred_region
      %s57 = ssub.s32 2048, 2048
      %58 = vsyncadd [#allocation6], %s57
      %s59 = sshll.u32 [#allocation7], 4
      %s60 = int_to_ptr.vmem [resolvable:$true] %s59
      %65 = dma.hbm_to_vmem [thread:$0]  %s7, 2048, %s60, [#allocation6], 128, 128, 8
    $region33: #{tpu_custom_call.1} parent=1 // pred_fallthru
      _
    // Predicated region
    $region34: #{tpu_custom_call.1} parent=1 // pred_check
      _
    $region35: #{tpu_custom_call.1} parent=1 // pred_check_branch
      %67 = sbr.rel (0) target = $region37
    $region36: #{tpu_custom_call.1} parent=1 // pred_region
      _
    $region37: #{tpu_custom_call.1} parent=1 // pred_fallthru
      _
    // Predicated region
    $region38: #{tpu_custom_call.1} parent=1 // pred_check
      _
    $region39: #{tpu_custom_call.1} parent=1 // pred_check_branch
      %69 = sbr.rel (0) target = $region41
    $region40: #{tpu_custom_call.1} parent=1 // pred_region
      %s71 = ssub.s32 2048, 2048
      %72 = vsyncadd [#allocation9], %s71
      %s73 = sshll.u32 [#allocation8], 4
      %s74 = int_to_ptr.vmem [resolvable:$true] %s73
      %79 = dma.hbm_to_vmem [thread:$0]  %s9, 2048, %s74, [#allocation9], 128, 128, 8
    $region41: #{tpu_custom_call.1} parent=1 // pred_fallthru
      _
    // Predicated region
    $region42: #{tpu_custom_call.1} parent=1 // pred_check
      _
    $region43: #{tpu_custom_call.1} parent=1 // pred_check_branch
      %81 = sbr.rel (0) target = $region45
    $region44: #{tpu_custom_call.1} parent=1 // pred_region
      _
    $region45: #{tpu_custom_call.1} parent=1 // pred_fallthru
      _
    // Predicated region
    $region46: #{tpu_custom_call.1} parent=1 // pred_check
      _
    $region47: #{tpu_custom_call.1} parent=1 // pred_check_branch
      %83 = sbr.rel (0) target = $region49
    $region48: #{tpu_custom_call.1} parent=1 // pred_region
      %84 = dma.done [#allocation3], 2048
    $region49: #{tpu_custom_call.1} parent=1 // pred_fallthru
      _
    // Predicated region
    $region50: #{tpu_custom_call.1} parent=1 // pred_check
      _
    $region51: #{tpu_custom_call.1} parent=1 // pred_check_branch
      %86 = sbr.rel (0) target = $region53
    $region52: #{tpu_custom_call.1} parent=1 // pred_region
      %87 = dma.done [#allocation6], 2048
    $region53: #{tpu_custom_call.1} parent=1 // pred_fallthru
      _
    // Predicated region
    $region54: #{tpu_custom_call.1} parent=1 // pred_check
      _
    $region55: #{tpu_custom_call.1} parent=1 // pred_check_branch
      %89 = sbr.rel (0) target = $region57
    $region56: #{tpu_custom_call.1} parent=1 // pred_region
      %90 = dma.done [#allocation6], 2048
    $region57: #{tpu_custom_call.1} parent=1 // pred_fallthru
      _
    // Predicated region
    $region58: #{tpu_custom_call.1} parent=1 // pred_check
      _
    $region59: #{tpu_custom_call.1} parent=1 // pred_check_branch
      %92 = sbr.rel (0) target = $region61
    $region60: #{tpu_custom_call.1} parent=1 // pred_region
      %93 = dma.done [#allocation9], 2048
    $region61: #{tpu_custom_call.1} parent=1 // pred_fallthru
      _
    %v94 = vld [vmem:[%s0] sm:$0xff]
    %v95 = vld [vmem:[%s1] sm:$0xff]
    %v96 = vld [vmem:[%s2] sm:$0x1]
    %98 = vset.pattern.permute.xlu0 0
    %99 = vperm.xlu0 %98, %v95
    %v100 = vpop.permute.xlu0 %99
    %v103 = vlaneseq
    %v104 = vshrl.u32 %v103, 7
    %v105 = vsub.s32 0, %v104
    %v106 = vrot.slane %v96, %v105
    %v108 = vmul.f32 %v100, %v106
    %v109 = vld [vmem:[%s3] sm:$0x1]
    %v111 = vlaneseq
    %v112 = vshrl.u32 %v111, 7
    %v113 = vsub.s32 0, %v112
    %v114 = vrot.slane %v109, %v113
    %v116 = vadd.f32 %v108, %v114
    %v117 = vmax.f32 %v116, 0.0
    %v118 = vld [vmem:[#allocation2] sm:$0xff]
    %v119 = vld [vmem:[#allocation2 + $0x8] sm:$0xff]
    %v120 = vld [vmem:[#allocation2 + $0x10] sm:$0xff]
    %v121 = vld [vmem:[#allocation2 + $0x18] sm:$0xff]
    %v122 = vld [vmem:[#allocation2 + $0x20] sm:$0xff]
    %v123 = vld [vmem:[#allocation2 + $0x28] sm:$0xff]
    %v124 = vld [vmem:[#allocation2 + $0x30] sm:$0xff]
    %v125 = vld [vmem:[#allocation2 + $0x38] sm:$0xff]
    %v126 = vld [vmem:[#allocation2 + $0x40] sm:$0xff]
    %v127 = vld [vmem:[#allocation2 + $0x48] sm:$0xff]
    %v128 = vld [vmem:[#allocation2 + $0x50] sm:$0xff]
    %v129 = vld [vmem:[#allocation2 + $0x58] sm:$0xff]
    %v130 = vld [vmem:[#allocation2 + $0x60] sm:$0xff]
    %v131 = vld [vmem:[#allocation2 + $0x68] sm:$0xff]
    %v132 = vld [vmem:[#allocation2 + $0x70] sm:$0xff]
    %v133 = vld [vmem:[#allocation2 + $0x78] sm:$0xff]
    %v134 = vld [vmem:[#allocation5] sm:$0xff]
    %v135 = vld [vmem:[#allocation5 + $0x8] sm:$0xff]
    %v136 = vld [vmem:[#allocation5 + $0x10] sm:$0xff]
    %v137 = vld [vmem:[#allocation5 + $0x18] sm:$0xff]
    %v138 = vld [vmem:[#allocation5 + $0x20] sm:$0xff]
    %v139 = vld [vmem:[#allocation5 + $0x28] sm:$0xff]
    %v140 = vld [vmem:[#allocation5 + $0x30] sm:$0xff]
    %v141 = vld [vmem:[#allocation5 + $0x38] sm:$0xff]
    %v142 = vld [vmem:[#allocation5 + $0x40] sm:$0xff]
    %v143 = vld [vmem:[#allocation5 + $0x48] sm:$0xff]
    %v144 = vld [vmem:[#allocation5 + $0x50] sm:$0xff]
    %v145 = vld [vmem:[#allocation5 + $0x58] sm:$0xff]
    %v146 = vld [vmem:[#allocation5 + $0x60] sm:$0xff]
    %v147 = vld [vmem:[#allocation5 + $0x68] sm:$0xff]
    %v148 = vld [vmem:[#allocation5 + $0x70] sm:$0xff]
    %v149 = vld [vmem:[#allocation5 + $0x78] sm:$0xff]
    %150 = vmatprep.subr.mxu0 0.0
    %151 = vmatpush1.msra.mxu0 %v134
    %152 = vmatprep.subr.mxu0 0.0
    %153 = vmatpush1.msra.mxu0 %v135
    %154 = vmatprep.subr.mxu0 0.0
    %155 = vmatpush1.msra.mxu0 %v136
    %156 = vmatprep.subr.mxu0 0.0
    %157 = vmatpush1.msra.mxu0 %v137
    %158 = vmatprep.subr.mxu0 0.0
    %159 = vmatpush1.msra.mxu0 %v138
    %160 = vmatprep.subr.mxu0 0.0
    %161 = vmatpush1.msra.mxu0 %v139
    %162 = vmatprep.subr.mxu0 0.0
    %163 = vmatpush1.msra.mxu0 %v140
    %164 = vmatprep.subr.mxu0 0.0
    %165 = vmatpush1.msra.mxu0 %v141
    %166 = vmatprep.subr.mxu0 0.0
    %167 = vmatpush1.msra.mxu0 %v142
    %168 = vmatprep.subr.mxu0 0.0
    %169 = vmatpush1.msra.mxu0 %v143
    %170 = vmatprep.subr.mxu0 0.0
    %171 = vmatpush1.msra.mxu0 %v144
    %172 = vmatprep.subr.mxu0 0.0
    %173 = vmatpush1.msra.mxu0 %v145
    %174 = vmatprep.subr.mxu0 0.0
    %175 = vmatpush1.msra.mxu0 %v146
    %176 = vmatprep.subr.mxu0 0.0
    %177 = vmatpush1.msra.mxu0 %v147
    %178 = vmatprep.subr.mxu0 0.0
    %179 = vmatpush1.msra.mxu0 %v148
    %180 = vmatprep.subr.mxu0 0.0
    %181 = vmatpush1.msra.mxu0 %v149
    %182 = vmatprep.subr.mxu0 0.0
    %183 = vmatpush1.msra.mxu0 0.0
    %184 = vmatprep.subr.mxu0 0.0
    %185 = vmatpush1.msra.mxu0 0.0
    %186 = vmatprep.subr.mxu0 0.0
    %187 = vmatpush1.msra.mxu0 0.0
    %188 = vmatprep.subr.mxu0 0.0
    %189 = vmatpush1.msra.mxu0 0.0
    %190 = vmatprep.subr.mxu0 0.0
    %191 = vmatpush1.msra.mxu0 0.0
    %192 = vmatprep.subr.mxu0 0.0
    %193 = vmatpush1.msra.mxu0 0.0
    %194 = vmatprep.subr.mxu0 0.0
    %195 = vmatpush1.msra.mxu0 0.0
    %196 = vmatprep.subr.mxu0 0.0
    %197 = vmatpush1.msra.mxu0 0.0
    %198 = vmatprep.subr.mxu0 0.0
    %199 = vmatpush1.msra.mxu0 0.0
    %200 = vmatprep.subr.mxu0 0.0
    %201 = vmatpush1.msra.mxu0 0.0
    %202 = vmatprep.subr.mxu0 0.0
    %203 = vmatpush1.msra.mxu0 0.0
    %204 = vmatprep.subr.mxu0 0.0
    %205 = vmatpush1.msra.mxu0 0.0
    %206 = vmatprep.subr.mxu0 0.0
    %207 = vmatpush1.msra.mxu0 0.0
    %208 = vmatprep.subr.mxu0 0.0
    %209 = vmatpush1.msra.mxu0 0.0
    %210 = vmatprep.subr.mxu0 0.0
    %211 = vmatpush1.msra.mxu0 0.0
    %212 = vmatprep.subr.mxu0 0.0
    %213 = vmatpush1.msra.mxu0 0.0
    %214 = vmatprep.mubr.f32.mxu0 0.0
    %215 = vmatmul.mubr.f32.gmra.mrb[0].mxu0 %v117
    %v216 = vpop.f32.mrb[0].mxu0
    %v217 = vadd.f32 0.0, %v216
    %v218 = vpop.f32.mrb[0].mxu0
    %219 = vdwg.mxu0
    %220 = vmatprep.subr.mxu0 0.0
    %221 = vmatpush1.msra.mxu0 %v118
    %222 = vmatprep.subr.mxu0 0.0
    %223 = vmatpush1.msra.mxu0 %v119
    %224 = vmatprep.subr.mxu0 0.0
    %225 = vmatpush1.msra.mxu0 %v120
    %226 = vmatprep.subr.mxu0 0.0
    %227 = vmatpush1.msra.mxu0 %v121
    %228 = vmatprep.subr.mxu0 0.0
    %229 = vmatpush1.msra.mxu0 %v122
    %230 = vmatprep.subr.mxu0 0.0
    %231 = vmatpush1.msra.mxu0 %v123
    %232 = vmatprep.subr.mxu0 0.0
    %233 = vmatpush1.msra.mxu0 %v124
    %234 = vmatprep.subr.mxu0 0.0
    %235 = vmatpush1.msra.mxu0 %v125
    %236 = vmatprep.subr.mxu0 0.0
    %237 = vmatpush1.msra.mxu0 %v126
    %238 = vmatprep.subr.mxu0 0.0
    %239 = vmatpush1.msra.mxu0 %v127
    %240 = vmatprep.subr.mxu0 0.0
    %241 = vmatpush1.msra.mxu0 %v128
    %242 = vmatprep.subr.mxu0 0.0
    %243 = vmatpush1.msra.mxu0 %v129
    %244 = vmatprep.subr.mxu0 0.0
    %245 = vmatpush1.msra.mxu0 %v130
    %246 = vmatprep.subr.mxu0 0.0
    %247 = vmatpush1.msra.mxu0 %v131
    %248 = vmatprep.subr.mxu0 0.0
    %249 = vmatpush1.msra.mxu0 %v132
    %250 = vmatprep.subr.mxu0 0.0
    %251 = vmatpush1.msra.mxu0 %v133
    %252 = vmatprep.subr.mxu0 0.0
    %253 = vmatpush1.msra.mxu0 0.0
    %254 = vmatprep.subr.mxu0 0.0
    %255 = vmatpush1.msra.mxu0 0.0
    %256 = vmatprep.subr.mxu0 0.0
    %257 = vmatpush1.msra.mxu0 0.0
    %258 = vmatprep.subr.mxu0 0.0
    %259 = vmatpush1.msra.mxu0 0.0
    %260 = vmatprep.subr.mxu0 0.0
    %261 = vmatpush1.msra.mxu0 0.0
    %262 = vmatprep.subr.mxu0 0.0
    %263 = vmatpush1.msra.mxu0 0.0
    %264 = vmatprep.subr.mxu0 0.0
    %265 = vmatpush1.msra.mxu0 0.0
    %266 = vmatprep.subr.mxu0 0.0
    %267 = vmatpush1.msra.mxu0 0.0
    %268 = vmatprep.subr.mxu0 0.0
    %269 = vmatpush1.msra.mxu0 0.0
    %270 = vmatprep.subr.mxu0 0.0
    %271 = vmatpush1.msra.mxu0 0.0
    %272 = vmatprep.subr.mxu0 0.0
    %273 = vmatpush1.msra.mxu0 0.0
    %274 = vmatprep.subr.mxu0 0.0
    %275 = vmatpush1.msra.mxu0 0.0
    %276 = vmatprep.subr.mxu0 0.0
    %277 = vmatpush1.msra.mxu0 0.0
    %278 = vmatprep.subr.mxu0 0.0
    %279 = vmatpush1.msra.mxu0 0.0
    %280 = vmatprep.subr.mxu0 0.0
    %281 = vmatpush1.msra.mxu0 0.0
    %282 = vmatprep.subr.mxu0 0.0
    %283 = vmatpush1.msra.mxu0 0.0
    %284 = vmatprep.mubr.f32.mxu0 0.0
    %285 = vmatmul.mubr.f32.gmra.mrb[0].mxu0 %v94
    %v286 = vpop.f32.mrb[0].mxu0
    %v287 = vadd.f32 %v217, %v286
    %v288 = vpop.f32.mrb[0].mxu0
    %289 = vdwg.mxu0
    %v290 = vld [vmem:[%s6] sm:$0x1]
    %v292 = vlaneseq
    %v293 = vshrl.u32 %v292, 7
    %v294 = vsub.s32 0, %v293
    %v295 = vrot.slane %v290, %v294
    %v297 = vadd.f32 %v287, %v295
    %v298 = vmax.f32 %v297, 0.0
    %v299 = vld [vmem:[#allocation7] sm:$0xff]
    %v300 = vld [vmem:[#allocation7 + $0x8] sm:$0xff]
    %v301 = vld [vmem:[#allocation7 + $0x10] sm:$0xff]
    %v302 = vld [vmem:[#allocation7 + $0x18] sm:$0xff]
    %v303 = vld [vmem:[#allocation7 + $0x20] sm:$0xff]
    %v304 = vld [vmem:[#allocation7 + $0x28] sm:$0xff]
    %v305 = vld [vmem:[#allocation7 + $0x30] sm:$0xff]
    %v306 = vld [vmem:[#allocation7 + $0x38] sm:$0xff]
    %v307 = vld [vmem:[#allocation7 + $0x40] sm:$0xff]
    %v308 = vld [vmem:[#allocation7 + $0x48] sm:$0xff]
    %v309 = vld [vmem:[#allocation7 + $0x50] sm:$0xff]
    %v310 = vld [vmem:[#allocation7 + $0x58] sm:$0xff]
    %v311 = vld [vmem:[#allocation7 + $0x60] sm:$0xff]
    %v312 = vld [vmem:[#allocation7 + $0x68] sm:$0xff]
    %v313 = vld [vmem:[#allocation7 + $0x70] sm:$0xff]
    %v314 = vld [vmem:[#allocation7 + $0x78] sm:$0xff]
    %v315 = vld [vmem:[%s8] sm:$0x1]
    %v317 = vlaneseq
    %v318 = vshrl.u32 %v317, 7
    %v319 = vsub.s32 0, %v318
    %v320 = vrot.slane %v315, %v319
    %322 = vmatprep.subr.mxu0 0.0
    %323 = vmatpush1.msra.mxu0 %v299
    %324 = vmatprep.subr.mxu0 0.0
    %325 = vmatpush1.msra.mxu0 %v300
    %326 = vmatprep.subr.mxu0 0.0
    %327 = vmatpush1.msra.mxu0 %v301
    %328 = vmatprep.subr.mxu0 0.0
    %329 = vmatpush1.msra.mxu0 %v302
    %330 = vmatprep.subr.mxu0 0.0
    %331 = vmatpush1.msra.mxu0 %v303
    %332 = vmatprep.subr.mxu0 0.0
    %333 = vmatpush1.msra.mxu0 %v304
    %334 = vmatprep.subr.mxu0 0.0
    %335 = vmatpush1.msra.mxu0 %v305
    %336 = vmatprep.subr.mxu0 0.0
    %337 = vmatpush1.msra.mxu0 %v306
    %338 = vmatprep.subr.mxu0 0.0
    %339 = vmatpush1.msra.mxu0 %v307
    %340 = vmatprep.subr.mxu0 0.0
    %341 = vmatpush1.msra.mxu0 %v308
    %342 = vmatprep.subr.mxu0 0.0
    %343 = vmatpush1.msra.mxu0 %v309
    %344 = vmatprep.subr.mxu0 0.0
    %345 = vmatpush1.msra.mxu0 %v310
    %346 = vmatprep.subr.mxu0 0.0
    %347 = vmatpush1.msra.mxu0 %v311
    %348 = vmatprep.subr.mxu0 0.0
    %349 = vmatpush1.msra.mxu0 %v312
    %350 = vmatprep.subr.mxu0 0.0
    %351 = vmatpush1.msra.mxu0 %v313
    %352 = vmatprep.subr.mxu0 0.0
    %353 = vmatpush1.msra.mxu0 %v314
    %354 = vmatprep.subr.mxu0 0.0
    %355 = vmatpush1.msra.mxu0 0.0
    %356 = vmatprep.subr.mxu0 0.0
    %357 = vmatpush1.msra.mxu0 0.0
    %358 = vmatprep.subr.mxu0 0.0
    %359 = vmatpush1.msra.mxu0 0.0
    %360 = vmatprep.subr.mxu0 0.0
    %361 = vmatpush1.msra.mxu0 0.0
    %362 = vmatprep.subr.mxu0 0.0
    %363 = vmatpush1.msra.mxu0 0.0
    %364 = vmatprep.subr.mxu0 0.0
    %365 = vmatpush1.msra.mxu0 0.0
    %366 = vmatprep.subr.mxu0 0.0
    %367 = vmatpush1.msra.mxu0 0.0
    %368 = vmatprep.subr.mxu0 0.0
    %369 = vmatpush1.msra.mxu0 0.0
    %370 = vmatprep.subr.mxu0 0.0
    %371 = vmatpush1.msra.mxu0 0.0
    %372 = vmatprep.subr.mxu0 0.0
    %373 = vmatpush1.msra.mxu0 0.0
    %374 = vmatprep.subr.mxu0 0.0
    %375 = vmatpush1.msra.mxu0 0.0
    %376 = vmatprep.subr.mxu0 0.0
    %377 = vmatpush1.msra.mxu0 0.0
    %378 = vmatprep.subr.mxu0 0.0
    %379 = vmatpush1.msra.mxu0 0.0
    %380 = vmatprep.subr.mxu0 0.0
    %381 = vmatpush1.msra.mxu0 0.0
    %382 = vmatprep.subr.mxu0 0.0
    %383 = vmatpush1.msra.mxu0 0.0
    %384 = vmatprep.subr.mxu0 0.0
    %385 = vmatpush1.msra.mxu0 0.0
    %386 = vmatprep.mubr.f32.mxu0 0.0
    %387 = vmatmul.mubr.f32.gmra.mrb[0].mxu0 %v298
    %v388 = vpop.f32.mrb[0].mxu0
    %v389 = vadd.f32 %v320, %v388
    %v390 = vpop.f32.mrb[0].mxu0
    %391 = vdwg.mxu0
    %v392 = vmax.f32 %v389, 0.0
    %v393 = vld [vmem:[#allocation8] sm:$0xff]
    %v394 = vld [vmem:[#allocation8 + $0x8] sm:$0xff]
    %v395 = vld [vmem:[#allocation8 + $0x10] sm:$0xff]
    %v396 = vld [vmem:[#allocation8 + $0x18] sm:$0xff]
    %v397 = vld [vmem:[#allocation8 + $0x20] sm:$0xff]
    %v398 = vld [vmem:[#allocation8 + $0x28] sm:$0xff]
    %v399 = vld [vmem:[#allocation8 + $0x30] sm:$0xff]
    %v400 = vld [vmem:[#allocation8 + $0x38] sm:$0xff]
    %v401 = vld [vmem:[#allocation8 + $0x40] sm:$0xff]
    %v402 = vld [vmem:[#allocation8 + $0x48] sm:$0xff]
    %v403 = vld [vmem:[#allocation8 + $0x50] sm:$0xff]
    %v404 = vld [vmem:[#allocation8 + $0x58] sm:$0xff]
    %v405 = vld [vmem:[#allocation8 + $0x60] sm:$0xff]
    %v406 = vld [vmem:[#allocation8 + $0x68] sm:$0xff]
    %v407 = vld [vmem:[#allocation8 + $0x70] sm:$0xff]
    %v408 = vld [vmem:[#allocation8 + $0x78] sm:$0xff]
    %v409 = vld [vmem:[%s10] sm:$0x1]
    %v411 = vlaneseq
    %v412 = vshrl.u32 %v411, 7
    %v413 = vsub.s32 0, %v412
    %v414 = vrot.slane %v409, %v413
    %416 = vmatprep.subr.mxu0 0.0
    %417 = vmatpush1.msra.mxu0 %v393
    %418 = vmatprep.subr.mxu0 0.0
    %419 = vmatpush1.msra.mxu0 %v394
    %420 = vmatprep.subr.mxu0 0.0
    %421 = vmatpush1.msra.mxu0 %v395
    %422 = vmatprep.subr.mxu0 0.0
    %423 = vmatpush1.msra.mxu0 %v396
    %424 = vmatprep.subr.mxu0 0.0
    %425 = vmatpush1.msra.mxu0 %v397
    %426 = vmatprep.subr.mxu0 0.0
    %427 = vmatpush1.msra.mxu0 %v398
    %428 = vmatprep.subr.mxu0 0.0
    %429 = vmatpush1.msra.mxu0 %v399
    %430 = vmatprep.subr.mxu0 0.0
    %431 = vmatpush1.msra.mxu0 %v400
    %432 = vmatprep.subr.mxu0 0.0
    %433 = vmatpush1.msra.mxu0 %v401
    %434 = vmatprep.subr.mxu0 0.0
    %435 = vmatpush1.msra.mxu0 %v402
    %436 = vmatprep.subr.mxu0 0.0
    %437 = vmatpush1.msra.mxu0 %v403
    %438 = vmatprep.subr.mxu0 0.0
    %439 = vmatpush1.msra.mxu0 %v404
    %440 = vmatprep.subr.mxu0 0.0
    %441 = vmatpush1.msra.mxu0 %v405
    %442 = vmatprep.subr.mxu0 0.0
    %443 = vmatpush1.msra.mxu0 %v406
    %444 = vmatprep.subr.mxu0 0.0
    %445 = vmatpush1.msra.mxu0 %v407
    %446 = vmatprep.subr.mxu0 0.0
    %447 = vmatpush1.msra.mxu0 %v408
    %448 = vmatprep.subr.mxu0 0.0
    %449 = vmatpush1.msra.mxu0 0.0
    %450 = vmatprep.subr.mxu0 0.0
    %451 = vmatpush1.msra.mxu0 0.0
    %452 = vmatprep.subr.mxu0 0.0
    %453 = vmatpush1.msra.mxu0 0.0
    %454 = vmatprep.subr.mxu0 0.0
    %455 = vmatpush1.msra.mxu0 0.0
    %456 = vmatprep.subr.mxu0 0.0
    %457 = vmatpush1.msra.mxu0 0.0
    %458 = vmatprep.subr.mxu0 0.0
    %459 = vmatpush1.msra.mxu0 0.0
    %460 = vmatprep.subr.mxu0 0.0
    %461 = vmatpush1.msra.mxu0 0.0
    %462 = vmatprep.subr.mxu0 0.0
    %463 = vmatpush1.msra.mxu0 0.0
    %464 = vmatprep.subr.mxu0 0.0
    %465 = vmatpush1.msra.mxu0 0.0
    %466 = vmatprep.subr.mxu0 0.0
    %467 = vmatpush1.msra.mxu0 0.0
    %468 = vmatprep.subr.mxu0 0.0
    %469 = vmatpush1.msra.mxu0 0.0
    %470 = vmatprep.subr.mxu0 0.0
    %471 = vmatpush1.msra.mxu0 0.0
    %472 = vmatprep.subr.mxu0 0.0
    %473 = vmatpush1.msra.mxu0 0.0
    %474 = vmatprep.subr.mxu0 0.0
    %475 = vmatpush1.msra.mxu0 0.0
    %476 = vmatprep.subr.mxu0 0.0
    %477 = vmatpush1.msra.mxu0 0.0
    %478 = vmatprep.subr.mxu0 0.0
    %479 = vmatpush1.msra.mxu0 0.0
    %480 = vmatprep.mubr.f32.mxu0 0.0
    %481 = vmatmul.mubr.f32.gmra.mrb[0].mxu0 %v392
    %v482 = vpop.f32.mrb[0].mxu0
    %v483 = vadd.f32 %v414, %v482
    %v484 = vpop.f32.mrb[0].mxu0
    %485 = vdwg.mxu0
    %486 = vst [vmem:[#allocation10] sm:$0xff] %v483
    // Predicated region
    $region62: #{tpu_custom_call.1} parent=1 // pred_check
      _
    $region63: #{tpu_custom_call.1} parent=1 // pred_check_branch
      %488 = sbr.rel (0) target = $region65
    $region64: #{tpu_custom_call.1} parent=1 // pred_region
      %s490 = ssub.s32 128, 128
      %491 = vsyncadd [#allocation4], %s490
      %s493 = sshll.u32 [#allocation10], 4
      %s494 = int_to_ptr.vmem [resolvable:$true] %s493
      %496 = dma.vmem_to_hbm [thread:$0]  %s494, 128, %s11, [#allocation4]
    $region65: #{tpu_custom_call.1} parent=1 // pred_fallthru
      _
    // Predicated region
    $region66: #{tpu_custom_call.1} parent=1 // pred_check
      _
    $region67: #{tpu_custom_call.1} parent=1 // pred_check_branch
      %498 = sbr.rel (0) target = $region69
    $region68: #{tpu_custom_call.1} parent=1 // pred_region
      %499 = dma.done [#allocation4], 128
    $region69: #{tpu_custom_call.1} parent=1 // pred_fallthru
      _
    %500 = vsyncpa [#allocation3], 1
    %501 = vsyncpa [#allocation6], 1
    %502 = vsyncpa [#allocation9], 1
    %503 = vsyncpa [#allocation4], 1

</llo_original>
